<compile_context>
chip_gen: v7x
topology: tpu7x:2x2x1
jax: 0.10.0
libtpu: 0.0.40
codegen_flags: <defaults>
</compile_context>

<pallas_src>
import functools

import jax
import jax.numpy as jnp
from jax.experimental import pallas as pl
from jax.experimental.pallas import tpu as pltpu


def _dropblock_kernel(rc_ref, x_ref, o_ref, *, window_size, width):
    # rc_ref: SMEM int32[2] -> (random_row, random_col)
    # x_ref / o_ref: VMEM (tile_bc, H*W) lane-dense block
    row = rc_ref[0]
    col = rc_ref[1]
    hw = x_ref.shape[-1]

    # Flat lane index over the spatial plane (shared by every B*C row).
    idx = jax.lax.broadcasted_iota(jnp.int32, (1, hw), 1)
    start0 = row * width + col

    def window_row_mask(k):
        s = start0 + k * width
        return (idx >= s) & (idx < s + window_size)

    in_window = window_row_mask(0)
    for k in range(1, window_size):
        in_window = in_window | window_row_mask(k)

    # Single fused select; mask (1, HW) broadcasts over the (tile_bc, HW) block.
    o_ref[...] = jnp.where(in_window, jnp.array(0, x_ref.dtype), x_ref[...])


def drop_block(x, key, window_size=3):
    """Zero a random window_size x window_size spatial patch across all B, C."""
    B, C, H, W = x.shape
    if H <= window_size or W <= window_size:
        raise ValueError("spatial dims must be larger than window_size")

    kr, kc = jax.random.split(key)
    # torch.randint(0, high) samples from [0, high)
    random_row = jax.random.randint(kr, (), 0, H - window_size, dtype=jnp.int32)
    random_col = jax.random.randint(kc, (), 0, W - window_size, dtype=jnp.int32)
    rc = jnp.stack([random_row, random_col]).astype(jnp.int32)

    BC = B * C
    HW = H * W
    x_flat = x.reshape(BC, HW)  # free bitcast for contiguous NCHW

    # Pick a B*C row-tile so one block is <= ~2 MiB (double-buffered in+out
    # then fits comfortably in default scoped VMEM on v5e/v6e/v7x).
    bytes_per_row = HW * jnp.dtype(x.dtype).itemsize
    target_block_bytes = 2 * 1024 * 1024
    if BC * bytes_per_row <= target_block_bytes:
        tile_bc = BC  # full extent -> always a legal block dim
    else:
        tile_bc = max(8, (target_block_bytes // bytes_per_row) // 8 * 8)
    grid = (pl.cdiv(BC, tile_bc),)

    kernel = functools.partial(
        _dropblock_kernel, window_size=window_size, width=W
    )

    out_flat = pl.pallas_call(
        kernel,
        out_shape=jax.ShapeDtypeStruct((BC, HW), x.dtype),
        grid_spec=pltpu.PrefetchScalarGridSpec(
            num_scalar_prefetch=1,
            grid=grid,
            in_specs=[
                pl.BlockSpec((tile_bc, HW), lambda i, rc: (i, 0)),
            ],
            out_specs=pl.BlockSpec((tile_bc, HW), lambda i, rc: (i, 0)),
        ),
        compiler_params=pltpu.CompilerParams(
            dimension_semantics=("parallel",),
            vmem_limit_bytes=32 * 1024 * 1024,
        ),
    )(rc, x_flat)

    return out_flat.reshape(B, C, H, W)


if __name__ == "__main__":
    key = jax.random.PRNGKey(0)
    k_x, k_rc = jax.random.split(key)

    # Small shape consistent with the module's example input (2, 3, 9, 9).
    x = jax.random.uniform(k_x, (2, 3, 9, 9), dtype=jnp.float32)

    window_size = 3
    out = drop_block(x, k_rc, window_size=window_size)
    out = jax.block_until_ready(out)

    # Sanity check against a pure-JAX reference with identical RNG draws.
    kr, kc = jax.random.split(k_rc)
    row = int(jax.random.randint(kr, (), 0, 9 - window_size, dtype=jnp.int32))
    col = int(jax.random.randint(kc, (), 0, 9 - window_size, dtype=jnp.int32))
    ref = x.at[:, :, row:row + window_size, col:col + window_size].set(0.0)
    assert jnp.allclose(out, ref), "mismatch vs reference"
    assert out.shape == x.shape and out.dtype == x.dtype

    print("KERNEL_OK")
</pallas_src>

<mosaic_0001>
module attributes {stable_mosaic.version = 11 : i64} {
  func.func @_dropblock_kernel(%arg0: i32, %arg1: memref<2xi32, #tpu.memory_space<smem>>, %arg2: memref<6x81xf32, #tpu.memory_space<vmem>>, %arg3: memref<6x81xf32, #tpu.memory_space<vmem>>) attributes {dimension_semantics = [#tpu.dimension_semantics<parallel>], iteration_bounds = array<i64: 1>, scalar_prefetch = 1 : i64, scratch_operands = 0 : i64, tpu.core_type = #tpu.core_type<tc>, window_params = [{transform_indices = @transform_0, window_bounds = array<i64: 6, 81>}, {transform_indices = @transform_1, window_bounds = array<i64: 6, 81>}]} {
    %c0 = arith.constant 0 : index
    %0 = memref.load %arg1[%c0] : memref<2xi32, #tpu.memory_space<smem>>
    %c1 = arith.constant 1 : index
    %1 = memref.load %arg1[%c1] : memref<2xi32, #tpu.memory_space<smem>>
    %2 = tpu.iota {dimensions = array<i32: 1>} : vector<1x81xi32>
    %c9_i32 = arith.constant 9 : i32
    %3 = arith.muli %0, %c9_i32 : i32
    %4 = arith.addi %3, %1 : i32
    %c0_i32 = arith.constant 0 : i32
    %5 = arith.addi %4, %c0_i32 : i32
    %6 = vector.broadcast %5 : i32 to vector<1x81xi32>
    %7 = arith.cmpi sge, %2, %6 : vector<1x81xi32>
    %c3_i32 = arith.constant 3 : i32
    %8 = arith.addi %5, %c3_i32 : i32
    %9 = vector.broadcast %8 : i32 to vector<1x81xi32>
    %10 = arith.cmpi slt, %2, %9 : vector<1x81xi32>
    %11 = arith.andi %7, %10 : vector<1x81xi1>
    %c9_i32_0 = arith.constant 9 : i32
    %12 = arith.addi %4, %c9_i32_0 : i32
    %13 = vector.broadcast %12 : i32 to vector<1x81xi32>
    %14 = arith.cmpi sge, %2, %13 : vector<1x81xi32>
    %c3_i32_1 = arith.constant 3 : i32
    %15 = arith.addi %12, %c3_i32_1 : i32
    %16 = vector.broadcast %15 : i32 to vector<1x81xi32>
    %17 = arith.cmpi slt, %2, %16 : vector<1x81xi32>
    %18 = arith.andi %14, %17 : vector<1x81xi1>
    %19 = arith.ori %11, %18 : vector<1x81xi1>
    %c18_i32 = arith.constant 18 : i32
    %20 = arith.addi %4, %c18_i32 : i32
    %21 = vector.broadcast %20 : i32 to vector<1x81xi32>
    %22 = arith.cmpi sge, %2, %21 : vector<1x81xi32>
    %c3_i32_2 = arith.constant 3 : i32
    %23 = arith.addi %20, %c3_i32_2 : i32
    %24 = vector.broadcast %23 : i32 to vector<1x81xi32>
    %25 = arith.cmpi slt, %2, %24 : vector<1x81xi32>
    %26 = arith.andi %22, %25 : vector<1x81xi1>
    %27 = arith.ori %19, %26 : vector<1x81xi1>
    %c0_3 = arith.constant 0 : index
    %c0_4 = arith.constant 0 : index
    %28 = vector.load %arg2[%c0_3, %c0_4] : memref<6x81xf32, #tpu.memory_space<vmem>>, vector<6x81xf32>
    %cst = arith.constant 0.000000e+00 : f32
    %29 = vector.shape_cast %27 : vector<1x81xi1> to vector<1x81xi1>
    %30 = vector.broadcast %29 : vector<1x81xi1> to vector<6x81xi1>
    %31 = vector.broadcast %cst : f32 to vector<6x81xf32>
    %32 = arith.select %30, %31, %28 : vector<6x81xi1>, vector<6x81xf32>
    %c0_5 = arith.constant 0 : index
    %c0_6 = arith.constant 0 : index
    %33 = vector.load %arg3[%c0_5, %c0_6] : memref<6x81xf32, #tpu.memory_space<vmem>>, vector<6x81xf32>
    tpu.vector_store %arg3[%c0_5, %c0_6], %32 {strides = array<i32>} : memref<6x81xf32, #tpu.memory_space<vmem>>, vector<6x81xf32>,
    return
  }
  func.func @transform_0(%arg0: i32, %arg1: memref<2xi32, #tpu.memory_space<smem>>) -> (i32, i32) {
    %c0_i32 = arith.constant 0 : i32
    %c0_i32_0 = arith.constant 0 : i32
    return %arg0, %c0_i32 : i32, i32
  }
  func.func @transform_1(%arg0: i32, %arg1: memref<2xi32, #tpu.memory_space<smem>>) -> (i32, i32) {
    %c0_i32 = arith.constant 0 : i32
    %c0_i32_0 = arith.constant 0 : i32
    return %arg0, %c0_i32 : i32, i32
  }
}

</mosaic_0001>

<llo_original>
// kernel: tpu_custom_call.1
$region0: #{tpu_custom_call.1}
  #allocation0 [shape = 'u32[]', space=smem, size = 0x4, offset = 0x4, fixed_abs, tag = 'smem constant byte address 0x4 - core index']
  #allocation1 [shape = 'u32[144,128]{1,0:T(1,128)}', space=vmem, size = 0x12000, scoped, tag = 'internal scratch']
  #allocation2 [shape = 's32[1]{0}', space=sflag, size = 0x4, scoped, tag = 'scoped memory for tpu_custom_call.1']
  #allocation3 [shape = 'u8[512]{0}', space=smem, size = 0x200, scoped, tag = 'prefetched SMEM operand 0']
  %s0 = inlined_call_operand.hbm [shape: s32[2], index: 0, kind: input, shape index: {}]
  %s1 = inlined_call_operand.hbm [shape: f32[6,81], index: 1, kind: input, shape index: {}]
  %s2 = inlined_call_operand.hbm [shape: f32[6,81], index: 2, kind: output, shape index: {}]
  %s3 = sld [smem:[#allocation0]]
  $region18: #{tpu_custom_call.1} parent=0
    _
  %s5 = ssub.s32 1, %s3
  %s6 = scalar_select 0, %s5, %s3
  %8 = dma.hbm_to_smem %s0, 16, [#allocation3], [#allocation2]
  %9 = dma.done [#allocation2], 16
  %10 = sfence
  $region1: #{tpu_custom_call.1} parent=0
    #allocation4 [shape = 'u8[4096]{0}', space=vmem, size = 0x1000, scoped, tag = 'input window, operand 1, single buffered']
    #allocation5 [shape = 's32[1]{0}', space=sflag, size = 0x4, scoped, tag = 'scoped memory for tpu_custom_call.1']
    #allocation6 [shape = 's32[1]{0}', space=sflag, size = 0x4, scoped, tag = 'scoped memory for tpu_custom_call.1']
    #allocation7 [shape = 'u8[4096]{0}', space=vmem, size = 0x1000, scoped, tag = 'output window, operand 0, single buffered']
    %11 = vsyncpa [#allocation5], 0
    %12 = vsyncpa [#allocation6], 0
    // Predicated region
    $region2: #{tpu_custom_call.1} parent=1 // pred_check
      _
    $region3: #{tpu_custom_call.1} parent=1 // pred_check_branch
      %14 = sbr.rel (0) target = $region5
    $region4: #{tpu_custom_call.1} parent=1 // pred_region
      %s16 = ssub.s32 128, 128
      %17 = vsyncadd [#allocation5], %s16
      %s19 = sshll.u32 [#allocation4], 4
      %s20 = int_to_ptr.vmem [resolvable:$true] %s19
      %22 = dma.hbm_to_vmem [thread:$0]  %s1, 128, %s20, [#allocation5]
    $region5: #{tpu_custom_call.1} parent=1 // pred_fallthru
      _
    // Predicated region
    $region6: #{tpu_custom_call.1} parent=1 // pred_check
      _
    $region7: #{tpu_custom_call.1} parent=1 // pred_check_branch
      %24 = sbr.rel (0) target = $region9
    $region8: #{tpu_custom_call.1} parent=1 // pred_region
      %25 = dma.done [#allocation5], 128
    $region9: #{tpu_custom_call.1} parent=1 // pred_fallthru
      _
    %s26 = sld [smem:[#allocation3]]
    %s27 = sld [smem:[#allocation3 + $0x1]]
    %v28 = vlaneseq
    %v29 = vand.u32 %v28, 127
    %s30 = smul.u32 %s26, 9
    %s31 = sadd.s32 %s30, %s27
    %v32 = vstv %s31
    %vm33 = vcmp.ge.s32.totalorder %v29, %v32
    %s34 = sadd.s32 %s31, 3
    %v35 = vstv %s34
    %vm36 = vcmp.lt.s32.totalorder %v29, %v35
    %vm37 = vmand %vm33, %vm36
    %s38 = sadd.s32 %s31, 9
    %v39 = vstv %s38
    %vm40 = vcmp.ge.s32.totalorder %v29, %v39
    %s41 = sadd.s32 %s31, 12
    %v42 = vstv %s41
    %vm43 = vcmp.lt.s32.totalorder %v29, %v42
    %vm44 = vmand %vm40, %vm43
    %vm45 = vmor %vm37, %vm44
    %s46 = sadd.s32 %s31, 18
    %v47 = vstv %s46
    %vm48 = vcmp.ge.s32.totalorder %v29, %v47
    %s49 = sadd.s32 %s31, 21
    %v50 = vstv %s49
    %vm51 = vcmp.lt.s32.totalorder %v29, %v50
    %vm52 = vmand %vm48, %vm51
    %vm53 = vmor %vm45, %vm52
    %v54 = vld [vmem:[#allocation4] sm:$0x3f]
    %v55 = vsel %vm53, 1, 0
    %vm56 = vcmp.eq.s32.totalorder %v55, 1
    %v57 = vsel %vm56, 0.0, %v54
    %vm58 = vcmask 660480
    %59 = vst.msk [vmem:[#allocation7] sm:$0x3f] %vm58, %v57
    // Predicated region
    $region10: #{tpu_custom_call.1} parent=1 // pred_check
      _
    $region11: #{tpu_custom_call.1} parent=1 // pred_check_branch
      %61 = sbr.rel (0) target = $region13
    $region12: #{tpu_custom_call.1} parent=1 // pred_region
      %s63 = ssub.s32 128, 128
      %64 = vsyncadd [#allocation6], %s63
      %s66 = sshll.u32 [#allocation7], 4
      %s67 = int_to_ptr.vmem [resolvable:$true] %s66
      %69 = dma.vmem_to_hbm [thread:$0]  %s67, 128, %s2, [#allocation6]
    $region13: #{tpu_custom_call.1} parent=1 // pred_fallthru
      _
    // Predicated region
    $region14: #{tpu_custom_call.1} parent=1 // pred_check
      _
    $region15: #{tpu_custom_call.1} parent=1 // pred_check_branch
      %71 = sbr.rel (0) target = $region17
    $region16: #{tpu_custom_call.1} parent=1 // pred_region
      %72 = dma.done [#allocation6], 128
    $region17: #{tpu_custom_call.1} parent=1 // pred_fallthru
      _
    %73 = vsyncpa [#allocation5], 1
    %74 = vsyncpa [#allocation6], 1

</llo_original>
